<compile_context>
chip_gen: v7x
topology: tpu7x:2x2x1
jax: 0.10.0
libtpu: 0.0.40
codegen_flags: <defaults>
</compile_context>

<pallas_src>
import jax
import jax.numpy as jnp
from jax.experimental import pallas as pl
from jax.experimental.pallas import tpu as pltpu


def _round_up(x, m):
    return ((x + m - 1) // m) * m


def _vmem_capacity_bytes():
    try:
        return int(pltpu.get_tpu_info().vmem_capacity_bytes)
    except Exception:
        return 128 * 1024 * 1024  # v5e/v6e physical VMEM


def _vmem_bytes_needed(Bb, Td, S_enc_p, d_p, K_p, attn_bytes):
    """Rough per-step VMEM footprint: 2x-buffered blocks + scratch + f32 temporaries."""
    dec_blk = Bb * Td * d_p * 2                 # bf16 decoder tile
    enc_blk = Bb * S_enc_p * K_p * 2            # bf16 raw encoder block (largest input)
    mask_blk = Bb * 8 * S_enc_p * 4             # f32 mask bias (sublane-padded)
    w_blk = K_p * d_p * 2                       # bf16 projection weight
    b_blk = 8 * d_p * 4                         # f32 bias (sublane-padded)
    ctx_blk = Bb * Td * d_p * 4                 # f32 context out tile
    attn_blk = Bb * Td * S_enc_p * attn_bytes   # attention out tile
    pipelined = 2 * (dec_blk + enc_blk + mask_blk + w_blk + b_blk + ctx_blk + attn_blk)
    scratch = 2 * Bb * S_enc_p * d_p * 2        # eproj + eprojT (bf16)
    temps = 3 * 4 * Bb * Td * S_enc_p + 4 * Bb * S_enc_p * d_p  # f32 scores/exp/attn + f32 proj
    return pipelined + scratch + temps


def _select_tiles(B, S_dec, S_enc_p, d_p, K_p, attn_bytes, budget):
    """Largest (batch_block, dec_tile) that fits the VMEM budget; prefer large Td."""
    bb_cap = 8
    if B >= 2:
        # Keep >= 2 batch blocks so both v7x TensorCores get at least one block each.
        bb_cap = min(bb_cap, max(1, B // 2))
    bb_cands = [d for d in range(min(B, bb_cap), 0, -1) if B % d == 0]

    s_dec8 = _round_up(S_dec, 8)
    td_cands, t, seen = [], 512, set()
    while t >= 8:
        c = min(t, s_dec8)
        if c not in seen:
            seen.add(c)
            td_cands.append(c)
        t //= 2

    for td in td_cands:            # prioritize large decoder tiles (fills the MXU M dim)
        for bb in bb_cands:        # then as many batch rows as fit
            if _vmem_bytes_needed(bb, td, S_enc_p, d_p, K_p, attn_bytes) <= budget:
                return bb, td
    return 1, 8


def _attn_kernel(dec_ref, enc_ref, maskb_ref, wt_ref, b_ref,
                 ctx_ref, attn_ref, eproj_ref, eprojT_ref):
    # dec_ref   : (Bb, Td, d_p)       decoder tile            (bf16)
    # enc_ref   : (Bb, S_enc_p, K_p)  raw encoder block       (bf16)
    # maskb_ref : (Bb, 1, S_enc_p)    additive mask bias      (f32, 0 or -1e30)
    # wt_ref    : (K_p, d_p)          projection weight^T     (bf16)
    # b_ref     : (1, d_p)            projection bias         (f32)
    # ctx_ref   : (Bb, Td, d_p)       context output          (f32)
    # attn_ref  : (Bb, Td, S_enc_p)   attention output        (bf16 by default)
    # eproj_ref : (Bb, S_enc_p, d_p)  scratch: projected encoder
    # eprojT_ref: (Bb, d_p, S_enc_p)  scratch: transposed projection (scores rhs)
    compute_dtype = eproj_ref.dtype

    # Project the encoder states once per batch block (first decoder tile only); reuse the
    # VMEM-resident result (and its transpose) for every decoder tile of this batch block.
    @pl.when(pl.program_id(1) == 0)
    def _project():
        Bb, S_enc_p, K_p = enc_ref.shape
        d_p = wt_ref.shape[1]
        # S_enc_p multiple of 128 -> collapsing the leading dims is a tile-aligned no-op.
        enc2d = enc_ref[...].reshape(Bb * S_enc_p, K_p)
        proj = jnp.dot(enc2d, wt_ref[...], preferred_element_type=jnp.float32) + b_ref[...]
        proj = proj.reshape(Bb, S_enc_p, d_p).astype(compute_dtype)
        eproj_ref[...] = proj
        eprojT_ref[...] = jnp.transpose(proj, (0, 2, 1))  # once per batch block (XLU)

    dec = dec_ref[...].astype(compute_dtype)              # (Bb, Td, d_p)

    # scores[b,i,j] = sum_d dec[b,i,d] * eproj[b,j,d] ; plain (Td,d)@(d,S_enc) per batch row.
    scores = jnp.einsum("bid,bdj->bij", dec, eprojT_ref[...],
                        preferred_element_type=jnp.float32)        # f32
    masked = scores + maskb_ref[...]                               # additive mask (no log/NaN)

    # Softmax over encoder positions in f32. Fully-masked rows -> uniform (documented deviation).
    m = jnp.max(masked, axis=-1, keepdims=True)
    e = jnp.exp(masked - m)
    s = jnp.sum(e, axis=-1, keepdims=True)
    attn = e * pl.reciprocal(s, approx=False)  # exact: attn_dist is an exposed output

    # context[b,i,:] = sum_j attn[b,i,j] * eproj[b,j,:]
    ctx = jnp.einsum("bij,bjd->bid", attn.astype(compute_dtype), eproj_ref[...],
                     preferred_element_type=jnp.float32)

    ctx_ref[...] = ctx.astype(ctx_ref.dtype)
    attn_ref[...] = attn.astype(attn_ref.dtype)


def scaled_dot_product_attention(decoder_states, decoder_mask, encoder_states,
                                 encoder_mask, proj_weight, proj_bias,
                                 *, compute_dtype=jnp.bfloat16,
                                 attn_dtype=jnp.bfloat16,
                                 batch_block=None, dec_tile=None):
    """Mirrors ScaledDotProductAttention.forward (decoder_mask unused, as in PyTorch)."""
    del decoder_mask  # unused by the reference module
    B, S_dec, d_model = decoder_states.shape
    _, S_enc, K = encoder_states.shape
    assert K == 2 * d_model

    # --- lane-dense padding targets (last dims multiples of 128, sublane dims of 8) ---------
    d_p = _round_up(d_model, 128)
    K_p = _round_up(K, 128)
    S_enc_p = _round_up(S_enc, 128)

    # --- VMEM-aware tile selection -----------------------------------------------------------
    capacity = _vmem_capacity_bytes()
    budget = int(0.70 * capacity)
    attn_bytes = jnp.dtype(attn_dtype).itemsize
    auto_bb, auto_td = _select_tiles(B, S_dec, S_enc_p, d_p, K_p, attn_bytes, budget)
    Bb = batch_block if batch_block is not None else auto_bb
    Td = dec_tile if dec_tile is not None else auto_td
    Td = max(8, (Td // 8) * 8)
    Td = min(Td, _round_up(S_dec, 8))
    assert B % Bb == 0
    S_dec_p = _round_up(S_dec, Td)

    need = _vmem_bytes_needed(Bb, Td, S_enc_p, d_p, K_p, attn_bytes)
    vmem_limit = int(min(capacity, max(32 * 1024 * 1024, int(need * 1.3))))

    # --- glue (once, outside the hot loop): pad, cast MXU operands to bf16, build mask bias --
    f32 = jnp.float32
    dec_p = jnp.pad(decoder_states.astype(compute_dtype),
                    ((0, 0), (0, S_dec_p - S_dec), (0, d_p - d_model)))
    enc_p = jnp.pad(encoder_states.astype(compute_dtype),
                    ((0, 0), (0, S_enc_p - S_enc), (0, K_p - K)))
    wt_p = jnp.pad(proj_weight.T.astype(compute_dtype),
                   ((0, K_p - K), (0, d_p - d_model)))                   # (K_p, d_p)
    bias_p = jnp.pad(proj_bias.astype(f32), (0, d_p - d_model)).reshape(1, d_p)
    mask_valid = jnp.pad(encoder_mask.astype(f32), ((0, 0), (0, S_enc_p - S_enc)))
    mask_bias = jnp.where(mask_valid > 0, 0.0, -1e30).astype(f32).reshape(B, 1, S_enc_p)

    grid = (B // Bb, S_dec_p // Td)

    cost = pl.CostEstimate(
        flops=int(2 * B * S_enc_p * K_p * d_p + 4 * B * S_dec_p * S_enc_p * d_p),
        transcendentals=int(B * S_dec_p * S_enc_p),
        bytes_accessed=int(dec_p.size * 2 + enc_p.size * 2 + mask_bias.size * 4
                           + wt_p.size * 2 + bias_p.size * 4
                           + B * S_dec_p * d_p * 4
                           + B * S_dec_p * S_enc_p * attn_bytes),
    )

    ctx_pad, attn_pad = pl.pallas_call(
        _attn_kernel,
        out_shape=(
            jax.ShapeDtypeStruct((B, S_dec_p, d_p), jnp.float32),
            jax.ShapeDtypeStruct((B, S_dec_p, S_enc_p), attn_dtype),
        ),
        grid_spec=pltpu.PrefetchScalarGridSpec(
            num_scalar_prefetch=0,
            grid=grid,
            in_specs=[
                pl.BlockSpec((Bb, Td, d_p), lambda i, j: (i, j, 0)),
                pl.BlockSpec((Bb, S_enc_p, K_p), lambda i, j: (i, 0, 0)),
                pl.BlockSpec((Bb, 1, S_enc_p), lambda i, j: (i, 0, 0)),
                pl.BlockSpec((K_p, d_p), lambda i, j: (0, 0)),
                pl.BlockSpec((1, d_p), lambda i, j: (0, 0)),
            ],
            out_specs=[
                pl.BlockSpec((Bb, Td, d_p), lambda i, j: (i, j, 0)),
                pl.BlockSpec((Bb, Td, S_enc_p), lambda i, j: (i, j, 0)),
            ],
            scratch_shapes=[
                pltpu.VMEM((Bb, S_enc_p, d_p), compute_dtype),   # eproj
                pltpu.VMEM((Bb, d_p, S_enc_p), compute_dtype),   # eproj^T (scores rhs)
            ],
        ),
        compiler_params=pltpu.CompilerParams(
            # Batch blocks are independent (megacore-shardable on v7x); the decoder-tile axis
            # reuses the projection scratch, so it must stay sequential ("arbitrary").
            dimension_semantics=("parallel", "arbitrary"),
            vmem_limit_bytes=vmem_limit,
        ),
        cost_estimate=cost,
    )(dec_p, enc_p, mask_bias, wt_p, bias_p)

    ctx = ctx_pad[:, :S_dec, :d_model]
    attn_dist = attn_pad[:, :S_dec, :S_enc][..., None]   # matches torch unsqueeze(3)
    return ctx, attn_dist


def _reference_f32(decoder_states, encoder_states, encoder_mask, proj_weight, proj_bias):
    """Faithful f32 re-implementation of the PyTorch module's forward (log-mask form)."""
    enc_proj = encoder_states @ proj_weight.T + proj_bias
    weights = jnp.einsum("bid,bjd->bij", decoder_states, enc_proj)
    masked = weights + jnp.log(encoder_mask.astype(jnp.float32))[:, None, :]
    attn = jax.nn.softmax(masked, axis=2)
    ctx = jnp.einsum("bij,bjd->bid", attn, enc_proj)
    return ctx, attn[..., None]


def _reference_mixed(decoder_states, encoder_states, encoder_mask, proj_weight,
                     proj_bias, compute_dtype=jnp.bfloat16):
    """Mirrors the kernel's bf16-matmul / f32-accumulate recipe for a tight check."""
    cd = compute_dtype
    enc_proj = (jnp.einsum("bsk,kd->bsd", encoder_states.astype(cd),
                           proj_weight.T.astype(cd),
                           preferred_element_type=jnp.float32)
                + proj_bias).astype(cd)
    scores = jnp.einsum("bid,bjd->bij", decoder_states.astype(cd), enc_proj,
                        preferred_element_type=jnp.float32)
    bias = jnp.where(encoder_mask > 0, 0.0, -1e30).astype(jnp.float32)[:, None, :]
    attn = jax.nn.softmax(scores + bias, axis=2)
    ctx = jnp.einsum("bij,bjd->bid", attn.astype(cd), enc_proj,
                     preferred_element_type=jnp.float32)
    return ctx, attn[..., None]


if __name__ == "__main__":
    B, S_dec, S_enc, d_model = 2, 8, 8, 32

    key = jax.random.PRNGKey(0)
    k_dec, k_enc, k_w, k_b = jax.random.split(key, 4)

    decoder_states = jax.random.normal(k_dec, (B, S_dec, d_model), dtype=jnp.float32)
    encoder_states = jax.random.normal(k_enc, (B, S_enc, 2 * d_model), dtype=jnp.float32)
    decoder_mask = jnp.ones((B, S_dec), dtype=jnp.float32)  # unused by forward
    encoder_mask = jnp.ones((B, S_enc), dtype=jnp.float32)
    encoder_mask = encoder_mask.at[1, 6:].set(0.0)  # mask last 2 encoder positions of batch 1

    # Deterministic "Linear(2*d_model, d_model)" parameters (synthetic init).
    bound = 1.0 / jnp.sqrt(2.0 * d_model)
    proj_weight = jax.random.uniform(k_w, (d_model, 2 * d_model),
                                     minval=-bound, maxval=bound, dtype=jnp.float32)
    proj_bias = jax.random.uniform(k_b, (d_model,),
                                   minval=-bound, maxval=bound, dtype=jnp.float32)

    ctx, attn_dist = scaled_dot_product_attention(
        decoder_states, decoder_mask, encoder_states, encoder_mask,
        proj_weight, proj_bias)
    jax.block_until_ready((ctx, attn_dist))

    ctx_mix, attn_mix = _reference_mixed(decoder_states, encoder_states, encoder_mask,
                                         proj_weight, proj_bias)
    ctx_f32, attn_f32 = _reference_f32(decoder_states, encoder_states, encoder_mask,
                                       proj_weight, proj_bias)

    assert ctx.shape == (B, S_dec, d_model)
    assert attn_dist.shape == (B, S_dec, S_enc, 1)
    assert bool(jnp.all(jnp.isfinite(ctx))) and bool(jnp.all(jnp.isfinite(attn_dist)))
    # Tight check against a reference using the same bf16-matmul / f32-accumulate recipe
    # (attn_dist is stored in bf16, so tolerances cover its ~4e-3 quantization).
    assert jnp.allclose(ctx, ctx_mix, atol=1e-2, rtol=1e-2)
    assert jnp.allclose(attn_dist.astype(jnp.float32), attn_mix, atol=1e-2, rtol=1e-2)
    # Loose sanity check against the full-f32 module semantics (bf16 compute tolerance).
    assert jnp.allclose(ctx, ctx_f32, atol=1e-1, rtol=1e-1)
    assert jnp.allclose(attn_dist.astype(jnp.float32), attn_f32, atol=1e-1, rtol=1e-1)

    print("KERNEL_OK")
</pallas_src>

<mosaic_0001>
module attributes {stable_mosaic.version = 11 : i64} {
  func.func @_attn_kernel(%arg0: i32, %arg1: i32, %arg2: memref<1x8x128xbf16, #tpu.memory_space<vmem>>, %arg3: memref<1x128x128xbf16, #tpu.memory_space<vmem>>, %arg4: memref<1x1x128xf32, #tpu.memory_space<vmem>>, %arg5: memref<128x128xbf16, #tpu.memory_space<vmem>>, %arg6: memref<1x128xf32, #tpu.memory_space<vmem>>, %arg7: memref<1x8x128xf32, #tpu.memory_space<vmem>>, %arg8: memref<1x8x128xbf16, #tpu.memory_space<vmem>>, %arg9: memref<1x128x128xbf16, #tpu.memory_space<vmem>>, %arg10: memref<1x128x128xbf16, #tpu.memory_space<vmem>>) attributes {dimension_semantics = [#tpu.dimension_semantics<parallel>, #tpu.dimension_semantics<arbitrary>], iteration_bounds = array<i64: 2, 1>, scalar_prefetch = 0 : i64, scratch_operands = 2 : i64, tpu.core_type = #tpu.core_type<tc>, window_params = [{transform_indices = @transform_0, window_bounds = array<i64: 1, 8, 128>}, {transform_indices = @transform_1, window_bounds = array<i64: 1, 128, 128>}, {transform_indices = @transform_2, window_bounds = array<i64: 1, 1, 128>}, {pipeline_mode = #tpu.pipeline_mode<synchronous>, transform_indices = @transform_3, window_bounds = array<i64: 128, 128>}, {pipeline_mode = #tpu.pipeline_mode<synchronous>, transform_indices = @transform_4, window_bounds = array<i64: 1, 128>}, {transform_indices = @transform_5, window_bounds = array<i64: 1, 8, 128>}, {transform_indices = @transform_6, window_bounds = array<i64: 1, 8, 128>}]} {
    %c0_i32 = arith.constant 0 : i32
    %0 = arith.cmpi eq, %arg1, %c0_i32 : i32
    %1 = arith.extui %0 : i1 to i32
    %c0_i32_0 = arith.constant 0 : i32
    %2 = arith.cmpi ne, %1, %c0_i32_0 : i32
    scf.if %2 {
      %c0_21 = arith.constant 0 : index
      %c0_22 = arith.constant 0 : index
      %c0_23 = arith.constant 0 : index
      %25 = vector.load %arg3[%c0_21, %c0_22, %c0_23] : memref<1x128x128xbf16, #tpu.memory_space<vmem>>, vector<1x128x128xbf16>
      %26 = vector.shape_cast %25 : vector<1x128x128xbf16> to vector<128x128xbf16>
      %c0_24 = arith.constant 0 : index
      %c0_25 = arith.constant 0 : index
      %27 = vector.load %arg5[%c0_24, %c0_25] : memref<128x128xbf16, #tpu.memory_space<vmem>>, vector<128x128xbf16>
      %cst_26 = arith.constant dense<0.000000e+00> : vector<128x128xf32>
      %28 = tpu.matmul %26, %27, %cst_26 {dimension_numbers = #tpu.dot_dimension_numbers<[1], [0], [0], [1], [0, 0, 1, 1], [], []>} : vector<128x128xbf16>, vector<128x128xbf16>, vector<128x128xf32> -> vector<128x128xf32>
      %c0_27 = arith.constant 0 : index
      %c0_28 = arith.constant 0 : index
      %29 = vector.load %arg6[%c0_27, %c0_28] : memref<1x128xf32, #tpu.memory_space<vmem>>, vector<1x128xf32>
      %30 = vector.broadcast %29 : vector<1x128xf32> to vector<128x128xf32>
      %31 = arith.addf %28, %30 : vector<128x128xf32>
      %32 = vector.shape_cast %31 : vector<128x128xf32> to vector<1x128x128xf32>
      %33 = arith.truncf %32 : vector<1x128x128xf32> to vector<1x128x128xbf16>
      %c0_29 = arith.constant 0 : index
      %c0_30 = arith.constant 0 : index
      %c0_31 = arith.constant 0 : index
      %34 = vector.load %arg9[%c0_29, %c0_30, %c0_31] : memref<1x128x128xbf16, #tpu.memory_space<vmem>>, vector<1x128x128xbf16>
      tpu.vector_store %arg9[%c0_29, %c0_30, %c0_31], %33 {strides = array<i32>} : memref<1x128x128xbf16, #tpu.memory_space<vmem>>, vector<1x128x128xbf16>,
      %35 = tpu.transpose %33, [0, 2, 1] : vector<1x128x128xbf16> -> vector<1x128x128xbf16>
      %c0_32 = arith.constant 0 : index
      %c0_33 = arith.constant 0 : index
      %c0_34 = arith.constant 0 : index
      %36 = vector.load %arg10[%c0_32, %c0_33, %c0_34] : memref<1x128x128xbf16, #tpu.memory_space<vmem>>, vector<1x128x128xbf16>
      tpu.vector_store %arg10[%c0_32, %c0_33, %c0_34], %35 {strides = array<i32>} : memref<1x128x128xbf16, #tpu.memory_space<vmem>>, vector<1x128x128xbf16>,
    } else {
    }
    %c0 = arith.constant 0 : index
    %c0_1 = arith.constant 0 : index
    %c0_2 = arith.constant 0 : index
    %3 = vector.load %arg2[%c0, %c0_1, %c0_2] : memref<1x8x128xbf16, #tpu.memory_space<vmem>>, vector<1x8x128xbf16>
    %c0_3 = arith.constant 0 : index
    %c0_4 = arith.constant 0 : index
    %c0_5 = arith.constant 0 : index
    %4 = vector.load %arg10[%c0_3, %c0_4, %c0_5] : memref<1x128x128xbf16, #tpu.memory_space<vmem>>, vector<1x128x128xbf16>
    "tpu.trace_start"() <{level = 10 : i32, message = "bid,bdj->bij"}> : () -> ()
    %cst = arith.constant dense<0.000000e+00> : vector<1x8x128xf32>
    %5 = tpu.matmul %3, %4, %cst {dimension_numbers = #tpu.dot_dimension_numbers<[2], [1], [1], [2], [0, 0, 0, 1, 1, 2], [0], [0]>} : vector<1x8x128xbf16>, vector<1x128x128xbf16>, vector<1x8x128xf32> -> vector<1x8x128xf32>
    "tpu.trace_stop"() : () -> ()
    %c0_6 = arith.constant 0 : index
    %c0_7 = arith.constant 0 : index
    %c0_8 = arith.constant 0 : index
    %6 = vector.load %arg4[%c0_6, %c0_7, %c0_8] : memref<1x1x128xf32, #tpu.memory_space<vmem>>, vector<1x1x128xf32>
    %7 = vector.broadcast %6 : vector<1x1x128xf32> to vector<1x8x128xf32>
    %8 = arith.addf %5, %7 : vector<1x8x128xf32>
    %cst_9 = arith.constant dense<0xFF800000> : vector<1x8xf32>
    %9 = vector.multi_reduction <maximumf>, %8, %cst_9 [2] : vector<1x8x128xf32> to vector<1x8xf32>
    %10 = vector.shape_cast %9 : vector<1x8xf32> to vector<1x8x1xf32>
    %11 = vector.broadcast %10 : vector<1x8x1xf32> to vector<1x8x128xf32>
    %12 = arith.subf %8, %11 : vector<1x8x128xf32>
    %13 = math.exp %12 : vector<1x8x128xf32>
    %cst_10 = arith.constant dense<0.000000e+00> : vector<1x8xf32>
    %14 = vector.multi_reduction <add>, %13, %cst_10 [2] : vector<1x8x128xf32> to vector<1x8xf32>
    %15 = vector.shape_cast %14 : vector<1x8xf32> to vector<1x8x1xf32>
    %16 = tpu.reciprocal %15 : vector<1x8x1xf32> -> vector<1x8x1xf32>
    %17 = vector.broadcast %16 : vector<1x8x1xf32> to vector<1x8x128xf32>
    %18 = arith.mulf %13, %17 : vector<1x8x128xf32>
    %19 = arith.truncf %18 : vector<1x8x128xf32> to vector<1x8x128xbf16>
    %c0_11 = arith.constant 0 : index
    %c0_12 = arith.constant 0 : index
    %c0_13 = arith.constant 0 : index
    %20 = vector.load %arg9[%c0_11, %c0_12, %c0_13] : memref<1x128x128xbf16, #tpu.memory_space<vmem>>, vector<1x128x128xbf16>
    "tpu.trace_start"() <{level = 10 : i32, message = "bij,bjd->bid"}> : () -> ()
    %cst_14 = arith.constant dense<0.000000e+00> : vector<1x8x128xf32>
    %21 = tpu.matmul %19, %20, %cst_14 {dimension_numbers = #tpu.dot_dimension_numbers<[2], [1], [1], [2], [0, 0, 0, 1, 1, 2], [0], [0]>} : vector<1x8x128xbf16>, vector<1x128x128xbf16>, vector<1x8x128xf32> -> vector<1x8x128xf32>
    "tpu.trace_stop"() : () -> ()
    %c0_15 = arith.constant 0 : index
    %c0_16 = arith.constant 0 : index
    %c0_17 = arith.constant 0 : index
    %22 = vector.load %arg7[%c0_15, %c0_16, %c0_17] : memref<1x8x128xf32, #tpu.memory_space<vmem>>, vector<1x8x128xf32>
    tpu.vector_store %arg7[%c0_15, %c0_16, %c0_17], %21 {strides = array<i32>} : memref<1x8x128xf32, #tpu.memory_space<vmem>>, vector<1x8x128xf32>,
    %23 = arith.truncf %18 : vector<1x8x128xf32> to vector<1x8x128xbf16>
    %c0_18 = arith.constant 0 : index
    %c0_19 = arith.constant 0 : index
    %c0_20 = arith.constant 0 : index
    %24 = vector.load %arg8[%c0_18, %c0_19, %c0_20] : memref<1x8x128xbf16, #tpu.memory_space<vmem>>, vector<1x8x128xbf16>
    tpu.vector_store %arg8[%c0_18, %c0_19, %c0_20], %23 {strides = array<i32>} : memref<1x8x128xbf16, #tpu.memory_space<vmem>>, vector<1x8x128xbf16>,
    return
  }
  func.func @transform_0(%arg0: i32, %arg1: i32) -> (i32, i32, i32) {
    %c0_i32 = arith.constant 0 : i32
    %c0_i32_0 = arith.constant 0 : i32
    return %arg0, %arg1, %c0_i32 : i32, i32, i32
  }
  func.func @transform_1(%arg0: i32, %arg1: i32) -> (i32, i32, i32) {
    %c0_i32 = arith.constant 0 : i32
    %c0_i32_0 = arith.constant 0 : i32
    %c0_i32_1 = arith.constant 0 : i32
    return %arg0, %c0_i32, %c0_i32_0 : i32, i32, i32
  }
  func.func @transform_2(%arg0: i32, %arg1: i32) -> (i32, i32, i32) {
    %c0_i32 = arith.constant 0 : i32
    %c0_i32_0 = arith.constant 0 : i32
    %c0_i32_1 = arith.constant 0 : i32
    return %arg0, %c0_i32, %c0_i32_0 : i32, i32, i32
  }
  func.func @transform_3(%arg0: i32, %arg1: i32) -> (i32, i32) {
    %c0_i32 = arith.constant 0 : i32
    %c0_i32_0 = arith.constant 0 : i32
    %c0_i32_1 = arith.constant 0 : i32
    return %c0_i32, %c0_i32_0 : i32, i32
  }
  func.func @transform_4(%arg0: i32, %arg1: i32) -> (i32, i32) {
    %c0_i32 = arith.constant 0 : i32
    %c0_i32_0 = arith.constant 0 : i32
    %c0_i32_1 = arith.constant 0 : i32
    return %c0_i32, %c0_i32_0 : i32, i32
  }
  func.func @transform_5(%arg0: i32, %arg1: i32) -> (i32, i32, i32) {
    %c0_i32 = arith.constant 0 : i32
    %c0_i32_0 = arith.constant 0 : i32
    return %arg0, %arg1, %c0_i32 : i32, i32, i32
  }
  func.func @transform_6(%arg0: i32, %arg1: i32) -> (i32, i32, i32) {
    %c0_i32 = arith.constant 0 : i32
    %c0_i32_0 = arith.constant 0 : i32
    return %arg0, %arg1, %c0_i32 : i32, i32, i32
  }
}

</mosaic_0001>

<llo_original>
// kernel: tpu_custom_call.1
$region0: #{tpu_custom_call.1}
  #allocation0 [shape = 'u32[]', space=smem, size = 0x4, offset = 0x4, fixed_abs, tag = 'smem constant byte address 0x4 - core index']
  #allocation1 [shape = 'u32[144,128]{1,0:T(1,128)}', space=vmem, size = 0x12000, scoped, tag = 'internal scratch']
  #allocation2 [shape = 'bf16[1,128,128]{2,1,0:T(16,128)(2,1)}', space=vmem, size = 0x8000, scoped, tag = 'scratch operand']
  #allocation3 [shape = 'bf16[1,128,128]{2,1,0:T(16,128)(2,1)}', space=vmem, size = 0x8000, scoped, tag = 'scratch operand']
  %s0 = inlined_call_operand.hbm [shape: bf16[2,8,128], index: 0, kind: input, shape index: {}]
  %s1 = inlined_call_operand.hbm [shape: bf16[2,128,128], index: 1, kind: input, shape index: {}]
  %s2 = inlined_call_operand.vmem [shape: f32[2,1,128], index: 2, kind: input, shape index: {}]
  %s3 = inlined_call_operand.hbm [shape: bf16[128,128], index: 3, kind: input, shape index: {}]
  %s4 = inlined_call_operand.vmem [shape: f32[1,128], index: 4, kind: input, shape index: {}]
  %s5 = inlined_call_operand.hbm [shape: f32[2,8,128], index: 5, kind: output, shape index: {0}]
  %s6 = inlined_call_operand.hbm [shape: bf16[2,8,128], index: 6, kind: output, shape index: {1}]
  %7 = xla_tuple %s5, %s6
  %s8 = sld [smem:[#allocation0]]
  $region77: #{tpu_custom_call.1} parent=0
    _
  %s10 = ssub.s32 1, %s8
  %s11 = scalar_select 0, %s10, %s8
  $region1: #{tpu_custom_call.1} parent=0
    #allocation4 [shape = 'u8[4096]{0}', space=vmem, size = 0x1000, scoped, tag = 'input window, operand 0']
    #allocation5 [shape = 's32[2]{0}', space=sflag, size = 0x8, scoped, tag = 'scoped memory for tpu_custom_call.1']
    #allocation6 [shape = 's32[2]{0}', space=sflag, size = 0x8, scoped, tag = 'scoped memory for tpu_custom_call.1']
    #allocation7 [shape = 'u8[65536]{0}', space=vmem, size = 0x10000, scoped, tag = 'input window, operand 1']
    #allocation8 [shape = 's32[2]{0}', space=sflag, size = 0x8, scoped, tag = 'scoped memory for tpu_custom_call.1']
    #allocation9 [shape = 'u8[32768]{0}', space=vmem, size = 0x8000, scoped, tag = 'input window, operand 3, single buffered']
    #allocation10 [shape = 'u8[8192]{0}', space=vmem, size = 0x2000, scoped, tag = 'output window, operand 0']
    #allocation11 [shape = 'u8[4096]{0}', space=vmem, size = 0x1000, scoped, tag = 'output window, operand 1']
    #allocation12 [shape = 's32[2]{0}', space=sflag, size = 0x8, scoped, tag = 'scoped memory for tpu_custom_call.1']
    %12 = vsyncpa [#allocation5], 0
    %s13 = scalar_lea.sflag [#allocation5], 1
    %14 = vsyncpa %s13, 0
    %15 = vsyncpa [#allocation8], 0
    %s16 = scalar_lea.sflag [#allocation8], 1
    %17 = vsyncpa %s16, 0
    %18 = vsyncpa [#allocation6], 0
    %s19 = scalar_lea.sflag [#allocation6], 1
    %20 = vsyncpa %s19, 0
    %21 = vsyncpa [#allocation12], 0
    %s22 = scalar_lea.sflag [#allocation12], 1
    %23 = vsyncpa %s22, 0
    loop: start=0, step=1, limit=4
    $region2: #{tpu_custom_call.1} parent=1 // loop_pre_header
      _
    $region3: #{tpu_custom_call.1} parent=1 // loop_header
      %s25 = sphi 0, %s29
      %p26 = scmp.ge.s32.totalorder %s25, 4
      %s32 = sphi 0, %s44
      %s33 = sphi 0, %s40
      %s34 = sphi 0, %s32
      %s35 = sphi 0, %s33
      %s36 = sphi 0, %s34
      %s37 = sphi 0, %s35
      %s49 = sphi 0, %s51
      %s52 = sphi 0, %s49
      %s53 = sphi 0, %s52
      %s69 = sphi 0, %s53
      %s75 = sphi 0, %s77
      %s78 = sphi 0, %s75
      %s79 = sphi 0, %s78
      %s95 = sphi 0, %s79
      %s101 = sphi 0, %s103
      %s104 = sphi 0, %s101
      %s105 = sphi 0, %s104
      %s121 = sphi 0, %s105
      %s125 = sphi 0, %s125
      %s127 = sphi 0, %s125
      %s128 = sphi 0, %s127
      %s142 = sphi 0, %s128
      %s146 = sphi 0, %s146
      %s148 = sphi 0, %s146
      %s149 = sphi 0, %s148
      %s163 = sphi 0, %s149
      %s171 = sphi 0, %s173
      %s174 = sphi 0, %s171
      %s175 = sphi 0, %s174
      %s191 = sphi 0, %s175
      %s199 = sphi 0, %s201
      %s202 = sphi 0, %s199
      %s203 = sphi 0, %s202
      %s219 = sphi 0, %s203
    $region4: #{tpu_custom_call.1} parent=1 // loop_header_branch
      %28 = sbr.rel (%p26) target = $region8
    $region5: #{tpu_custom_call.1} parent=1 // loop_body
      %s30 = ssub.s32 %s25, 1
      %s31 = ssub.s32 %s25, 2
      %s38 = sadd.s32 1, %s33
      %p39 = scmp.ge.s32.totalorder %s38, 1
      %s40 = scalar_select %p39, 0, %s38
      %s41 = sadd.s32 1, %s32
      %s42 = scalar_select %p39, %s41, %s32
      %p43 = scmp.ge.s32.totalorder %s42, 2
      %s44 = scalar_select %p43, 0, %s42
      %s45 = ssub.s32 %s32, %s44
      %s46 = ssub.s32 %s33, %s40
      %s47 = sor.u32 %s45, %s46
      %p48 = scmp.eq.s32.totalorder %s47, 0
      %s50 = sadd.s32 %s49, 1
      %s51 = scalar_select %p48, %s49, %s50
      %p54 = pneg %p48
      %p55 = scmp.eq.s32.totalorder %s25, 1
      %p56 = por %p54, %p55
      %p57 = scmp.ne.s32.totalorder %s49, %s52
      %p58 = scmp.eq.s32.totalorder %s25, 0
      %p59 = por %p57, %p58
      %p60 = scmp.ne.s32.totalorder %s49, %s52
      %p61 = scmp.eq.s32.totalorder %s30, 1
      %p62 = por %p60, %p61
      %p63 = scmp.ne.s32.totalorder %s52, %s53
      %p64 = scmp.eq.s32.totalorder %s30, 0
      %p65 = por %p63, %p64
      %p66 = scmp.ne.s32.totalorder %s52, %s53
      %p67 = scmp.eq.s32.totalorder %s31, 1
      %p68 = por %p66, %p67
      %p70 = scmp.ne.s32.totalorder %s53, %s69
      %p71 = scmp.eq.s32.totalorder %s31, 0
      %p72 = por %p70, %p71
      %s73 = ssub.s32 %s32, %s44
      %p74 = scmp.eq.s32.totalorder %s73, 0
      %s76 = sadd.s32 %s75, 1
      %s77 = scalar_select %p74, %s75, %s76
      %p80 = pneg %p74
      %p81 = scmp.eq.s32.totalorder %s25, 1
      %p82 = por %p80, %p81
      %p83 = scmp.ne.s32.totalorder %s75, %s78
      %p84 = scmp.eq.s32.totalorder %s25, 0
      %p85 = por %p83, %p84
      %p86 = scmp.ne.s32.totalorder %s75, %s78
      %p87 = scmp.eq.s32.totalorder %s30, 1
      %p88 = por %p86, %p87
      %p89 = scmp.ne.s32.totalorder %s78, %s79
      %p90 = scmp.eq.s32.totalorder %s30, 0
      %p91 = por %p89, %p90
      %p92 = scmp.ne.s32.totalorder %s78, %s79
      %p93 = scmp.eq.s32.totalorder %s31, 1
      %p94 = por %p92, %p93
      %p96 = scmp.ne.s32.totalorder %s79, %s95
      %p97 = scmp.eq.s32.totalorder %s31, 0
      %p98 = por %p96, %p97
      %s99 = ssub.s32 %s32, %s44
      %p100 = scmp.eq.s32.totalorder %s99, 0
      %s102 = sadd.s32 %s101, 1
      %s103 = scalar_select %p100, %s101, %s102
      %p106 = pneg %p100
      %p107 = scmp.eq.s32.totalorder %s25, 1
      %p108 = por %p106, %p107
      %p109 = scmp.ne.s32.totalorder %s101, %s104
      %p110 = scmp.eq.s32.totalorder %s25, 0
      %p111 = por %p109, %p110
      %p112 = scmp.ne.s32.totalorder %s101, %s104
      %p113 = scmp.eq.s32.totalorder %s30, 1
      %p114 = por %p112, %p113
      %p115 = scmp.ne.s32.totalorder %s104, %s105
      %p116 = scmp.eq.s32.totalorder %s30, 0
      %p117 = por %p115, %p116
      %p118 = scmp.ne.s32.totalorder %s104, %s105
      %p119 = scmp.eq.s32.totalorder %s31, 1
      %p120 = por %p118, %p119
      %p122 = scmp.ne.s32.totalorder %s105, %s121
      %p123 = scmp.eq.s32.totalorder %s31, 0
      %p124 = por %p122, %p123
      %s126 = sadd.s32 %s125, 1
      %p129 = scmp.eq.s32.totalorder %s25, 1
      %p130 = scmp.ne.s32.totalorder %s125, %s127
      %p131 = scmp.eq.s32.totalorder %s25, 0
      %p132 = por %p130, %p131
      %p133 = scmp.ne.s32.totalorder %s125, %s127
      %p134 = scmp.eq.s32.totalorder %s30, 1
      %p135 = por %p133, %p134
      %p136 = scmp.ne.s32.totalorder %s127, %s128
      %p137 = scmp.eq.s32.totalorder %s30, 0
      %p138 = por %p136, %p137
      %p139 = scmp.ne.s32.totalorder %s127, %s128
      %p140 = scmp.eq.s32.totalorder %s31, 1
      %p141 = por %p139, %p140
      %p143 = scmp.ne.s32.totalorder %s128, %s142
      %p144 = scmp.eq.s32.totalorder %s31, 0
      %p145 = por %p143, %p144
      %s147 = sadd.s32 %s146, 1
      %p150 = scmp.eq.s32.totalorder %s25, 1
      %p151 = scmp.ne.s32.totalorder %s146, %s148
      %p152 = scmp.eq.s32.totalorder %s25, 0
      %p153 = por %p151, %p152
      %p154 = scmp.ne.s32.totalorder %s146, %s148
      %p155 = scmp.eq.s32.totalorder %s30, 1
      %p156 = por %p154, %p155
      %p157 = scmp.ne.s32.totalorder %s148, %s149
      %p158 = scmp.eq.s32.totalorder %s30, 0
      %p159 = por %p157, %p158
      %p160 = scmp.ne.s32.totalorder %s148, %s149
      %p161 = scmp.eq.s32.totalorder %s31, 1
      %p162 = por %p160, %p161
      %p164 = scmp.ne.s32.totalorder %s149, %s163
      %p165 = scmp.eq.s32.totalorder %s31, 0
      %p166 = por %p164, %p165
      %s167 = ssub.s32 %s32, %s44
      %s168 = ssub.s32 %s33, %s40
      %s169 = sor.u32 %s167, %s168
      %p170 = scmp.eq.s32.totalorder %s169, 0
      %s172 = sadd.s32 %s171, 1
      %s173 = scalar_select %p170, %s171, %s172
      %p176 = pneg %p170
      %p177 = scmp.eq.s32.totalorder %s25, 1
      %p178 = por %p176, %p177
      %p179 = scmp.ne.s32.totalorder %s171, %s174
      %p180 = scmp.eq.s32.totalorder %s25, 0
      %p181 = por %p179, %p180
      %p182 = scmp.ne.s32.totalorder %s171, %s174
      %p183 = scmp.eq.s32.totalorder %s30, 1
      %p184 = por %p182, %p183
      %p185 = scmp.ne.s32.totalorder %s174, %s175
      %p186 = scmp.eq.s32.totalorder %s30, 0
      %p187 = por %p185, %p186
      %p188 = scmp.ne.s32.totalorder %s174, %s175
      %p189 = scmp.eq.s32.totalorder %s31, 1
      %p190 = por %p188, %p189
      %p192 = scmp.ne.s32.totalorder %s175, %s191
      %p193 = scmp.eq.s32.totalorder %s31, 0
      %p194 = por %p192, %p193
      %s195 = ssub.s32 %s32, %s44
      %s196 = ssub.s32 %s33, %s40
      %s197 = sor.u32 %s195, %s196
      %p198 = scmp.eq.s32.totalorder %s197, 0
      %s200 = sadd.s32 %s199, 1
      %s201 = scalar_select %p198, %s199, %s200
      %p204 = pneg %p198
      %p205 = scmp.eq.s32.totalorder %s25, 1
      %p206 = por %p204, %p205
      %p207 = scmp.ne.s32.totalorder %s199, %s202
      %p208 = scmp.eq.s32.totalorder %s25, 0
      %p209 = por %p207, %p208
      %p210 = scmp.ne.s32.totalorder %s199, %s202
      %p211 = scmp.eq.s32.totalorder %s30, 1
      %p212 = por %p210, %p211
      %p213 = scmp.ne.s32.totalorder %s202, %s203
      %p214 = scmp.eq.s32.totalorder %s30, 0
      %p215 = por %p213, %p214
      %p216 = scmp.ne.s32.totalorder %s202, %s203
      %p217 = scmp.eq.s32.totalorder %s31, 1
      %p218 = por %p216, %p217
      %p220 = scmp.ne.s32.totalorder %s203, %s219
      %p221 = scmp.eq.s32.totalorder %s31, 0
      %p222 = por %p220, %p221
      %p223 = scmp.le.s32.totalorder 1, %s25
      %p224 = scmp.lt.s32.totalorder %s25, 3
      %p225 = pnand %p223, %p224
      %p226 = pneg %p225
      // Predicated region
      $region9: #{tpu_custom_call.1} parent=5 // pred_check
        _
      $region10: #{tpu_custom_call.1} parent=5 // pred_check_branch
        %228 = sbr.rel (%p225) target = $region12
      $region11: #{tpu_custom_call.1} parent=5 // pred_region
        %s229 = ssub.s32 %s25, 1
        // Predicated region
        $region13: #{tpu_custom_call.1} parent=11 // pred_check
          %p230 = pneg %p138
        $region14: #{tpu_custom_call.1} parent=11 // pred_check_branch
          %232 = sbr.rel (%p230) target = $region16
        $region15: #{tpu_custom_call.1} parent=11 // pred_region
          %s234 = ssub.s32 1024, 1024
          %235 = vsyncadd [#allocation8], %s234
          %s236 = sshll.u32 [#allocation9], 4
          %s237 = int_to_ptr.vmem [resolvable:$true] %s236
          %242 = dma.hbm_to_vmem [thread:$0]  %s3, 1024, %s237, [#allocation8], 64, 64, 4
        $region16: #{tpu_custom_call.1} parent=11 // pred_fallthru
          _
        // Predicated region
        $region17: #{tpu_custom_call.1} parent=11 // pred_check
          %p243 = pneg %p159
        $region18: #{tpu_custom_call.1} parent=11 // pred_check_branch
          %245 = sbr.rel (%p243) target = $region20
        $region19: #{tpu_custom_call.1} parent=11 // pred_region
          _
        $region20: #{tpu_custom_call.1} parent=11 // pred_fallthru
          _
      $region12: #{tpu_custom_call.1} parent=5 // pred_fallthru
        _
      %p246 = scmp.lt.s32.totalorder %s25, 2
      // Predicated region
      $region21: #{tpu_custom_call.1} parent=5 // pred_check
        %p247 = pneg %p246
      $region22: #{tpu_custom_call.1} parent=5 // pred_check_branch
        %249 = sbr.rel (%p247) target = $region24
      $region23: #{tpu_custom_call.1} parent=5 // pred_region
        // Predicated region
        $region25: #{tpu_custom_call.1} parent=23 // pred_check
          %p250 = pneg %p59
        $region26: #{tpu_custom_call.1} parent=23 // pred_check_branch
          %252 = sbr.rel (%p250) target = $region28
        $region27: #{tpu_custom_call.1} parent=23 // pred_region
          %s253 = sand.u32 %s49, 1
          %s254 = scalar_lea.sflag [#allocation5], %s253
          %s255 = sand.u32 %s49, 1
          %s256 = smul.addr %s255, 4
          %s257 = scalar_lea.vmem [#allocation4], %s256
          %s259 = ssub.s32 64, 64
          %260 = vsyncadd %s254, %s259
          %s261 = sadd.s32 %s33, %s32
          %s262 = smul.addr %s261, 64
          %s263 = scalar_lea.hbm %s0, %s262
          %s265 = sshll.u32 %s257, 4
          %s266 = int_to_ptr.vmem [resolvable:$true] %s265
          %268 = dma.hbm_to_vmem [thread:$0]  %s263, 64, %s266, %s254
        $region28: #{tpu_custom_call.1} parent=23 // pred_fallthru
          _
        // Predicated region
        $region29: #{tpu_custom_call.1} parent=23 // pred_check
          %p269 = pneg %p85
        $region30: #{tpu_custom_call.1} parent=23 // pred_check_branch
          %271 = sbr.rel (%p269) target = $region32
        $region31: #{tpu_custom_call.1} parent=23 // pred_region
          %s272 = sand.u32 %s25, 1
          %s273 = scalar_lea.sflag [#allocation8], %s272
          %s274 = sand.u32 %s75, 1
          %s275 = smul.addr %s274, 64
          %s276 = scalar_lea.vmem [#allocation7], %s275
          %s278 = ssub.s32 1024, 1024
          %279 = vsyncadd %s273, %s278
          %s280 = smul.addr %s32, 16
          %s281 = smul.addr %s280, 64
          %s282 = scalar_lea.hbm %s1, %s281
          %s283 = sshll.u32 %s276, 4
          %s284 = int_to_ptr.vmem [resolvable:$true] %s283
          %289 = dma.hbm_to_vmem [thread:$0]  %s282, 1024, %s284, %s273, 64, 64, 4
        $region32: #{tpu_custom_call.1} parent=23 // pred_fallthru
          _
        // Predicated region
        $region33: #{tpu_custom_call.1} parent=23 // pred_check
          %p290 = pneg %p111
        $region34: #{tpu_custom_call.1} parent=23 // pred_check_branch
          %292 = sbr.rel (%p290) target = $region36
        $region35: #{tpu_custom_call.1} parent=23 // pred_region
          %p293 = scmp.lt.s32.totalorder %s32, 1
          %s294 = scalar_select %p293, %s32, 1
          %s295 = scalar_lea.vmem %s2, %s294
        $region36: #{tpu_custom_call.1} parent=23 // pred_fallthru
          _
      $region24: #{tpu_custom_call.1} parent=5 // pred_fallthru
        _
      %p296 = scmp.le.s32.totalorder 1, %s25
      %p297 = scmp.lt.s32.totalorder %s25, 3
      %p298 = pnand %p296, %p297
      %p299 = pneg %p298
      // Predicated region
      $region37: #{tpu_custom_call.1} parent=5 // pred_check
        _
      $region38: #{tpu_custom_call.1} parent=5 // pred_check_branch
        %301 = sbr.rel (%p298) target = $region40
      $region39: #{tpu_custom_call.1} parent=5 // pred_region
        %s302 = ssub.s32 %s25, 1
        %s303 = sand.u32 %s52, 1
        %s304 = scalar_lea.sflag [#allocation5], %s303
        %s305 = sand.u32 %s52, 1
        %s306 = smul.addr %s305, 4
        %s307 = scalar_lea.vmem [#allocation4], %s306
        // Predicated region
        $region41: #{tpu_custom_call.1} parent=39 // pred_check
          %p308 = pneg %p65
        $region42: #{tpu_custom_call.1} parent=39 // pred_check_branch
          %310 = sbr.rel (%p308) target = $region44
        $region43: #{tpu_custom_call.1} parent=39 // pred_region
          %311 = dma.done %s304, 64
        $region44: #{tpu_custom_call.1} parent=39 // pred_fallthru
          _
        %s312 = sand.u32 %s30, 1
        %s313 = scalar_lea.sflag [#allocation8], %s312
        %s314 = sand.u32 %s78, 1
        %s315 = smul.addr %s314, 64
        %s316 = scalar_lea.vmem [#allocation7], %s315
        // Predicated region
        $region45: #{tpu_custom_call.1} parent=39 // pred_check
          %p317 = pneg %p91
        $region46: #{tpu_custom_call.1} parent=39 // pred_check_branch
          %319 = sbr.rel (%p317) target = $region48
        $region47: #{tpu_custom_call.1} parent=39 // pred_region
          %320 = dma.done %s313, 1024
        $region48: #{tpu_custom_call.1} parent=39 // pred_fallthru
          _
        // Predicated region
        $region49: #{tpu_custom_call.1} parent=39 // pred_check
          %p321 = pneg %p138
        $region50: #{tpu_custom_call.1} parent=39 // pred_check_branch
          %323 = sbr.rel (%p321) target = $region52
        $region51: #{tpu_custom_call.1} parent=39 // pred_region
          %324 = dma.done [#allocation8], 1024
        $region52: #{tpu_custom_call.1} parent=39 // pred_fallthru
          _
        %s325 = sand.u32 %s52, 1
        %s326 = scalar_lea.sflag [#allocation5], %s325
        %s327 = sand.u32 %s52, 1
        %s328 = smul.addr %s327, 4
        %s329 = scalar_lea.vmem [#allocation4], %s328
        %p330 = pneg %p65
        %p331 = pneg %p62
        %s332 = sand.u32 %s30, 1
        %s333 = scalar_lea.sflag [#allocation8], %s332
        %s334 = sand.u32 %s78, 1
        %s335 = smul.addr %s334, 64
        %s336 = scalar_lea.vmem [#allocation7], %s335
        %p337 = pneg %p91
        %p338 = pneg %p88
        %p339 = scmp.lt.s32.totalorder %s34, 1
        %s340 = scalar_select %p339, %s34, 1
        %s341 = scalar_lea.vmem %s2, %s340
        %p342 = pneg %p117
        %p343 = pneg %p114
        %p344 = pneg %p138
        %p345 = pneg %p135
        %p346 = pneg %p159
        %p347 = pneg %p156
        %p348 = pneg %p187
        %p349 = pneg %p184
        %s350 = sand.u32 %s174, 1
        %s351 = scalar_lea.sflag [#allocation6], %s350
        %s352 = sand.u32 %s174, 1
        %s353 = smul.addr %s352, 8
        %s354 = scalar_lea.vmem [#allocation10], %s353
        %p355 = pneg %p215
        %p356 = pneg %p212
        %s357 = sand.u32 %s202, 1
        %s358 = scalar_lea.sflag [#allocation12], %s357
        %s359 = sand.u32 %s202, 1
        %s360 = smul.addr %s359, 4
        %s361 = scalar_lea.vmem [#allocation11], %s360
        %p362 = scmp.lt.s32.totalorder %s34, 1
        %s363 = scalar_select %p362, %s34, 1
        %s364 = scalar_lea.vmem %s2, %s363
        %p366 = scmp.eq.s32.totalorder %s35, 0
        // Predicated region
        $region53: #{tpu_custom_call.1} parent=39 // pred_check
          %p367 = pneg %p366
        $region54: #{tpu_custom_call.1} parent=39 // pred_check_branch
          %369 = sbr.rel (%p367) target = $region56
        $region55: #{tpu_custom_call.1} parent=39 // pred_region
          %v370 = vld [vmem:[%s316] sm:$0xf]
          %v371 = vld [vmem:[%s316 + $0x4] sm:$0xf]
          %v372 = vld [vmem:[%s316 + $0x8] sm:$0xf]
          %v373 = vld [vmem:[%s316 + $0xc] sm:$0xf]
          %v374 = vld [vmem:[%s316 + $0x10] sm:$0xf]
          %v375 = vld [vmem:[%s316 + $0x14] sm:$0xf]
          %v376 = vld [vmem:[%s316 + $0x18] sm:$0xf]
          %v377 = vld [vmem:[%s316 + $0x1c] sm:$0xf]
          %v378 = vld [vmem:[%s316 + $0x20] sm:$0xf]
          %v379 = vld [vmem:[%s316 + $0x24] sm:$0xf]
          %v380 = vld [vmem:[%s316 + $0x28] sm:$0xf]
          %v381 = vld [vmem:[%s316 + $0x2c] sm:$0xf]
          %v382 = vld [vmem:[%s316 + $0x30] sm:$0xf]
          %v383 = vld [vmem:[%s316 + $0x34] sm:$0xf]
          %v384 = vld [vmem:[%s316 + $0x38] sm:$0xf]
          %v385 = vld [vmem:[%s316 + $0x3c] sm:$0xf]
          %v386 = vld [vmem:[#allocation9] sm:$0xf]
          %v387 = vld [vmem:[#allocation9 + $0x4] sm:$0xf]
          %v388 = vld [vmem:[#allocation9 + $0x8] sm:$0xf]
          %v389 = vld [vmem:[#allocation9 + $0xc] sm:$0xf]
          %v390 = vld [vmem:[#allocation9 + $0x10] sm:$0xf]
          %v391 = vld [vmem:[#allocation9 + $0x14] sm:$0xf]
          %v392 = vld [vmem:[#allocation9 + $0x18] sm:$0xf]
          %v393 = vld [vmem:[#allocation9 + $0x1c] sm:$0xf]
          %v394 = vld [vmem:[#allocation9 + $0x20] sm:$0xf]
          %v395 = vld [vmem:[#allocation9 + $0x24] sm:$0xf]
          %v396 = vld [vmem:[#allocation9 + $0x28] sm:$0xf]
          %v397 = vld [vmem:[#allocation9 + $0x2c] sm:$0xf]
          %v398 = vld [vmem:[#allocation9 + $0x30] sm:$0xf]
          %v399 = vld [vmem:[#allocation9 + $0x34] sm:$0xf]
          %v400 = vld [vmem:[#allocation9 + $0x38] sm:$0xf]
          %v401 = vld [vmem:[#allocation9 + $0x3c] sm:$0xf]
          %v402 = vld [vmem:[%s4] sm:$0x1]
          %v404 = vlaneseq
          %v405 = vshrl.u32 %v404, 7
          %v406 = vsub.s32 0, %v405
          %v407 = vrot.slane %v402, %v406
          %v425 = vunpack.c.l.b16 %v370
          %v426 = vunpack.c.l.b16 %v371
          %v427 = vunpack.c.l.b16 %v372
          %v428 = vunpack.c.l.b16 %v373
          %v429 = vunpack.c.l.b16 %v374
          %v430 = vunpack.c.l.b16 %v375
          %v431 = vunpack.c.l.b16 %v376
          %v432 = vunpack.c.l.b16 %v377
          %v433 = vunpack.c.l.b16 %v378
          %v434 = vunpack.c.l.b16 %v379
          %v435 = vunpack.c.l.b16 %v380
          %v436 = vunpack.c.l.b16 %v381
          %v437 = vunpack.c.l.b16 %v382
          %v438 = vunpack.c.l.b16 %v383
          %v439 = vunpack.c.l.b16 %v384
          %v440 = vunpack.c.l.b16 %v385
          %v441 = vpack.c.b16 %v426, %v425
          %v442 = vpack.c.b16 %v428, %v427
          %v443 = vpack.c.b16 %v430, %v429
          %v444 = vpack.c.b16 %v432, %v431
          %v445 = vpack.c.b16 %v434, %v433
          %v446 = vpack.c.b16 %v436, %v435
          %v447 = vpack.c.b16 %v438, %v437
          %v448 = vpack.c.b16 %v440, %v439
          %v473 = vunpack.c.l.b16 %v386
          %v474 = vunpack.c.l.b16 %v387
          %v475 = vunpack.c.l.b16 %v388
          %v476 = vunpack.c.l.b16 %v389
          %v477 = vunpack.c.l.b16 %v390
          %v478 = vunpack.c.l.b16 %v391
          %v479 = vunpack.c.l.b16 %v392
          %v480 = vunpack.c.l.b16 %v393
          %v481 = vunpack.c.l.b16 %v394
          %v482 = vunpack.c.l.b16 %v395
          %v483 = vunpack.c.l.b16 %v396
          %v484 = vunpack.c.l.b16 %v397
          %v485 = vunpack.c.l.b16 %v398
          %v486 = vunpack.c.l.b16 %v399
          %v487 = vunpack.c.l.b16 %v400
          %v488 = vunpack.c.l.b16 %v401
          %v489 = vpack.c.b16 %v474, %v473
          %v490 = vpack.c.b16 %v476, %v475
          %v491 = vpack.c.b16 %v478, %v477
          %v492 = vpack.c.b16 %v480, %v479
          %v493 = vpack.c.b16 %v482, %v481
          %v494 = vpack.c.b16 %v484, %v483
          %v495 = vpack.c.b16 %v486, %v485
          %v496 = vpack.c.b16 %v488, %v487
          %505 = vmatprep.subr.bf16.mxu0 0
          %506 = vmatpush1.bf16.msra.mxu0 %v489
          %507 = vmatprep.subr.bf16.mxu0 0
          %508 = vmatpush1.bf16.msra.mxu0 %v490
          %509 = vmatprep.subr.bf16.mxu0 0
          %510 = vmatpush1.bf16.msra.mxu0 %v491
          %511 = vmatprep.subr.bf16.mxu0 0
          %512 = vmatpush1.bf16.msra.mxu0 %v492
          %513 = vmatprep.subr.bf16.mxu0 0
          %514 = vmatpush1.bf16.msra.mxu0 %v493
          %515 = vmatprep.subr.bf16.mxu0 0
          %516 = vmatpush1.bf16.msra.mxu0 %v494
          %517 = vmatprep.subr.bf16.mxu0 0
          %518 = vmatpush1.bf16.msra.mxu0 %v495
          %519 = vmatprep.subr.bf16.mxu0 0
          %520 = vmatpush1.bf16.msra.mxu0 %v496
          %521 = vmatprep.subr.bf16.mxu0 0
          %522 = vmatpush1.bf16.msra.mxu0 0
          %523 = vmatprep.subr.bf16.mxu0 0
          %524 = vmatpush1.bf16.msra.mxu0 0
          %525 = vmatprep.subr.bf16.mxu0 0
          %526 = vmatpush1.bf16.msra.mxu0 0
          %527 = vmatprep.subr.bf16.mxu0 0
          %528 = vmatpush1.bf16.msra.mxu0 0
          %529 = vmatprep.subr.bf16.mxu0 0
          %530 = vmatpush1.bf16.msra.mxu0 0
          %531 = vmatprep.subr.bf16.mxu0 0
          %532 = vmatpush1.bf16.msra.mxu0 0
          %533 = vmatprep.subr.bf16.mxu0 0
          %534 = vmatpush1.bf16.msra.mxu0 0
          %535 = vmatprep.subr.bf16.mxu0 0
          %536 = vmatpush1.bf16.msra.mxu0 0
          %537 = vmatprep.mubr.bf16.mxu0 0
          %538 = vmatmul.mubr.bf16.gmra.mrb[0].mxu0 %v441
          %v539 = vpop.f32.mrb[0].mxu0
          %v540 = vadd.f32 %v407, %v539
          %v541 = vpop.f32.mrb[0].mxu0
          %v542 = vpop.f32.mrb[0].mxu0
          %v543 = vadd.f32 %v407, %v542
          %v544 = vpop.f32.mrb[0].mxu0
          %545 = vmatprep.mubr.bf16.mxu0 0
          %546 = vmatmul.mubr.bf16.gmra.mrb[0].mxu0 %v442
          %v547 = vpop.f32.mrb[0].mxu0
          %v548 = vadd.f32 %v407, %v547
          %v549 = vpop.f32.mrb[0].mxu0
          %v550 = vpop.f32.mrb[0].mxu0
          %v551 = vadd.f32 %v407, %v550
          %v552 = vpop.f32.mrb[0].mxu0
          %553 = vmatprep.mubr.bf16.mxu0 0
          %554 = vmatmul.mubr.bf16.gmra.mrb[0].mxu0 %v443
          %v555 = vpop.f32.mrb[0].mxu0
          %v556 = vadd.f32 %v407, %v555
          %v557 = vpop.f32.mrb[0].mxu0
          %v558 = vpop.f32.mrb[0].mxu0
          %v559 = vadd.f32 %v407, %v558
          %v560 = vpop.f32.mrb[0].mxu0
          %561 = vmatprep.mubr.bf16.mxu0 0
          %562 = vmatmul.mubr.bf16.gmra.mrb[0].mxu0 %v444
          %v563 = vpop.f32.mrb[0].mxu0
          %v564 = vadd.f32 %v407, %v563
          %v565 = vpop.f32.mrb[0].mxu0
          %v566 = vpop.f32.mrb[0].mxu0
          %v567 = vadd.f32 %v407, %v566
          %v568 = vpop.f32.mrb[0].mxu0
          %569 = vmatprep.mubr.bf16.mxu0 0
          %570 = vmatmul.mubr.bf16.gmra.mrb[0].mxu0 %v445
          %v571 = vpop.f32.mrb[0].mxu0
          %v572 = vadd.f32 %v407, %v571
          %v573 = vpop.f32.mrb[0].mxu0
          %v574 = vpop.f32.mrb[0].mxu0
          %v575 = vadd.f32 %v407, %v574
          %v576 = vpop.f32.mrb[0].mxu0
          %577 = vmatprep.mubr.bf16.mxu0 0
          %578 = vmatmul.mubr.bf16.gmra.mrb[0].mxu0 %v446
          %v579 = vpop.f32.mrb[0].mxu0
          %v580 = vadd.f32 %v407, %v579
          %v581 = vpop.f32.mrb[0].mxu0
          %v582 = vpop.f32.mrb[0].mxu0
          %v583 = vadd.f32 %v407, %v582
          %v584 = vpop.f32.mrb[0].mxu0
          %585 = vmatprep.mubr.bf16.mxu0 0
          %586 = vmatmul.mubr.bf16.gmra.mrb[0].mxu0 %v447
          %v587 = vpop.f32.mrb[0].mxu0
          %v588 = vadd.f32 %v407, %v587
          %v589 = vpop.f32.mrb[0].mxu0
          %v590 = vpop.f32.mrb[0].mxu0
          %v591 = vadd.f32 %v407, %v590
          %v592 = vpop.f32.mrb[0].mxu0
          %593 = vmatprep.mubr.bf16.mxu0 0
          %594 = vmatmul.mubr.bf16.gmra.mrb[0].mxu0 %v448
          %v595 = vpop.f32.mrb[0].mxu0
          %v596 = vadd.f32 %v407, %v595
          %v597 = vpop.f32.mrb[0].mxu0
          %v598 = vpop.f32.mrb[0].mxu0
          %v599 = vadd.f32 %v407, %v598
          %v600 = vpop.f32.mrb[0].mxu0
          %601 = vdwg.mxu0
          %v602 = vpack.c.bf16 %v543, %v540
          %v603 = vpack.c.bf16 %v551, %v548
          %v604 = vpack.c.bf16 %v559, %v556
          %v605 = vpack.c.bf16 %v567, %v564
          %v606 = vpack.c.bf16 %v575, %v572
          %v607 = vpack.c.bf16 %v583, %v580
          %v608 = vpack.c.bf16 %v591, %v588
          %v609 = vpack.c.bf16 %v599, %v596
          %610 = vst [vmem:[#allocation2] sm:$0xff] %v602
          %611 = vst [vmem:[#allocation2 + $0x8] sm:$0xff] %v603
          %612 = vst [vmem:[#allocation2 + $0x10] sm:$0xff] %v604
          %613 = vst [vmem:[#allocation2 + $0x18] sm:$0xff] %v605
          %614 = vst [vmem:[#allocation2 + $0x20] sm:$0xff] %v606
          %615 = vst [vmem:[#allocation2 + $0x28] sm:$0xff] %v607
          %616 = vst [vmem:[#allocation2 + $0x30] sm:$0xff] %v608
          %617 = vst [vmem:[#allocation2 + $0x38] sm:$0xff] %v609
          %618 = vxpose.xlu0.c.b16.start [1/8] %v602, 128
          %619 = vxpose.xlu0.c.b16.cont [2/8] %v603, 128
          %620 = vxpose.xlu0.c.b16.cont [3/8] %v604, 128
          %621 = vxpose.xlu0.c.b16.cont [4/8] %v605, 128
          %622 = vxpose.xlu0.c.b16.cont [5/8] %v606, 128
          %623 = vxpose.xlu0.c.b16.cont [6/8] %v607, 128
          %624 = vxpose.xlu0.c.b16.cont [7/8] %v608, 128
          %625 = vxpose.xlu0.c.b16.end [8/8] %v609, 128
          %v626 = vpop.trf.xlu0
          %v627 = vpop.trf.xlu0
          %v628 = vpop.trf.xlu0
          %v629 = vpop.trf.xlu0
          %v630 = vpop.trf.xlu0
          %v631 = vpop.trf.xlu0
          %v632 = vpop.trf.xlu0
          %v633 = vpop.trf.xlu0
          %634 = vst [vmem:[#allocation3] sm:$0xff] %v626
          %635 = vst [vmem:[#allocation3 + $0x8] sm:$0xff] %v627
          %636 = vst [vmem:[#allocation3 + $0x10] sm:$0xff] %v628
          %637 = vst [vmem:[#allocation3 + $0x18] sm:$0xff] %v629
          %638 = vst [vmem:[#allocation3 + $0x20] sm:$0xff] %v630
          %639 = vst [vmem:[#allocation3 + $0x28] sm:$0xff] %v631
          %640 = vst [vmem:[#allocation3 + $0x30] sm:$0xff] %v632
          %641 = vst [vmem:[#allocation3 + $0x38] sm:$0xff] %v633
        $region56: #{tpu_custom_call.1} parent=39 // pred_fallthru
          _
        %v642 = vld [vmem:[%s307] sm:$0xf]
        %v643 = vld [vmem:[#allocation3] sm:$0xff]
        %v644 = vld [vmem:[#allocation3 + $0x8] sm:$0xff]
        %v645 = vld [vmem:[#allocation3 + $0x10] sm:$0xff]
        %v646 = vld [vmem:[#allocation3 + $0x18] sm:$0xff]
        %v647 = vld [vmem:[#allocation3 + $0x20] sm:$0xff]
        %v648 = vld [vmem:[#allocation3 + $0x28] sm:$0xff]
        %v649 = vld [vmem:[#allocation3 + $0x30] sm:$0xff]
        %v650 = vld [vmem:[#allocation3 + $0x38] sm:$0xff]
        %v651 = vld [vmem:[%s364] sm:$0x1]
        %v653 = vlaneseq
        %v654 = vshrl.u32 %v653, 7
        %v655 = vsub.s32 0, %v654
        %v656 = vrot.slane %v651, %v655
        %658 = vmatprep.subr.bf16.mxu0 0
        %659 = vmatpush1.bf16.msra.mxu0 %v643
        %660 = vmatprep.subr.bf16.mxu0 0
        %661 = vmatpush1.bf16.msra.mxu0 %v644
        %662 = vmatprep.subr.bf16.mxu0 0
        %663 = vmatpush1.bf16.msra.mxu0 %v645
        %664 = vmatprep.subr.bf16.mxu0 0
        %665 = vmatpush1.bf16.msra.mxu0 %v646
        %666 = vmatprep.subr.bf16.mxu0 0
        %667 = vmatpush1.bf16.msra.mxu0 %v647
        %668 = vmatprep.subr.bf16.mxu0 0
        %669 = vmatpush1.bf16.msra.mxu0 %v648
        %670 = vmatprep.subr.bf16.mxu0 0
        %671 = vmatpush1.bf16.msra.mxu0 %v649
        %672 = vmatprep.subr.bf16.mxu0 0
        %673 = vmatpush1.bf16.msra.mxu0 %v650
        %674 = vmatprep.subr.bf16.mxu0 0
        %675 = vmatpush1.bf16.msra.mxu0 0
        %676 = vmatprep.subr.bf16.mxu0 0
        %677 = vmatpush1.bf16.msra.mxu0 0
        %678 = vmatprep.subr.bf16.mxu0 0
        %679 = vmatpush1.bf16.msra.mxu0 0
        %680 = vmatprep.subr.bf16.mxu0 0
        %681 = vmatpush1.bf16.msra.mxu0 0
        %682 = vmatprep.subr.bf16.mxu0 0
        %683 = vmatpush1.bf16.msra.mxu0 0
        %684 = vmatprep.subr.bf16.mxu0 0
        %685 = vmatpush1.bf16.msra.mxu0 0
        %686 = vmatprep.subr.bf16.mxu0 0
        %687 = vmatpush1.bf16.msra.mxu0 0
        %688 = vmatprep.subr.bf16.mxu0 0
        %689 = vmatpush1.bf16.msra.mxu0 0
        %690 = vmatprep.mubr.bf16.mxu0 0
        %691 = vmatmul.mubr.bf16.gmra.mrb[0].mxu0 %v642
        %v692 = vpop.f32.mrb[0].mxu0
        %v693 = vadd.f32 %v656, %v692
        %v694 = vpop.f32.mrb[0].mxu0
        %v695 = vpop.f32.mrb[0].mxu0
        %v696 = vpop.f32.mrb[0].mxu0
        %697 = vdwg.mxu0
        %698 = vmax.xlane.f32.xlu0 %v693
        %v699 = vpop.xlane.xlu0 %698
        %v700 = vsub.f32 %v693, %v699
        %v701 = vmul.f32 %v700, 1.442695
        %v702 = vpow.pop %v701
        %703 = vadd.xlane.f32.xlu0 %v702
        %v704 = vpop.xlane.xlu0 %703
        %v705 = vrcp.pop %v704
        %v706 = vmul.f32 %v702, %v705
        %v707 = vpack.c.bf16 %v706, %v706
        %v708 = vld [vmem:[#allocation2] sm:$0xff]
        %v709 = vld [vmem:[#allocation2 + $0x8] sm:$0xff]
        %v710 = vld [vmem:[#allocation2 + $0x10] sm:$0xff]
        %v711 = vld [vmem:[#allocation2 + $0x18] sm:$0xff]
        %v712 = vld [vmem:[#allocation2 + $0x20] sm:$0xff]
        %v713 = vld [vmem:[#allocation2 + $0x28] sm:$0xff]
        %v714 = vld [vmem:[#allocation2 + $0x30] sm:$0xff]
        %v715 = vld [vmem:[#allocation2 + $0x38] sm:$0xff]
        %716 = vmatprep.subr.bf16.mxu0 0
        %717 = vmatpush1.bf16.msra.mxu0 %v708
        %718 = vmatprep.subr.bf16.mxu0 0
        %719 = vmatpush1.bf16.msra.mxu0 %v709
        %720 = vmatprep.subr.bf16.mxu0 0
        %721 = vmatpush1.bf16.msra.mxu0 %v710
        %722 = vmatprep.subr.bf16.mxu0 0
        %723 = vmatpush1.bf16.msra.mxu0 %v711
        %724 = vmatprep.subr.bf16.mxu0 0
        %725 = vmatpush1.bf16.msra.mxu0 %v712
        %726 = vmatprep.subr.bf16.mxu0 0
        %727 = vmatpush1.bf16.msra.mxu0 %v713
        %728 = vmatprep.subr.bf16.mxu0 0
        %729 = vmatpush1.bf16.msra.mxu0 %v714
        %730 = vmatprep.subr.bf16.mxu0 0
        %731 = vmatpush1.bf16.msra.mxu0 %v715
        %732 = vmatprep.subr.bf16.mxu0 0
        %733 = vmatpush1.bf16.msra.mxu0 0
        %734 = vmatprep.subr.bf16.mxu0 0
        %735 = vmatpush1.bf16.msra.mxu0 0
        %736 = vmatprep.subr.bf16.mxu0 0
        %737 = vmatpush1.bf16.msra.mxu0 0
        %738 = vmatprep.subr.bf16.mxu0 0
        %739 = vmatpush1.bf16.msra.mxu0 0
        %740 = vmatprep.subr.bf16.mxu0 0
        %741 = vmatpush1.bf16.msra.mxu0 0
        %742 = vmatprep.subr.bf16.mxu0 0
        %743 = vmatpush1.bf16.msra.mxu0 0
        %744 = vmatprep.subr.bf16.mxu0 0
        %745 = vmatpush1.bf16.msra.mxu0 0
        %746 = vmatprep.subr.bf16.mxu0 0
        %747 = vmatpush1.bf16.msra.mxu0 0
        %748 = vmatprep.mubr.bf16.mxu0 0
        %749 = vmatmul.mubr.bf16.gmra.mrb[0].mxu0 %v707
        %v750 = vpop.f32.mrb[0].mxu0
        %v751 = vadd.f32 0.0, %v750
        %v752 = vpop.f32.mrb[0].mxu0
        %v753 = vpop.f32.mrb[0].mxu0
        %v754 = vpop.f32.mrb[0].mxu0
        %755 = vdwg.mxu0
        %756 = vst [vmem:[%s354] sm:$0xff] %v751
        %757 = vst [vmem:[%s361] sm:$0xf] %v707
        %s758 = sand.u32 %s174, 1
        %s759 = scalar_lea.sflag [#allocation6], %s758
        %s760 = sand.u32 %s174, 1
        %s761 = smul.addr %s760, 8
        %s762 = scalar_lea.vmem [#allocation10], %s761
        %s763 = sand.u32 %s202, 1
        %s764 = scalar_lea.sflag [#allocation12], %s763
        %s765 = sand.u32 %s202, 1
        %s766 = smul.addr %s765, 4
        %s767 = scalar_lea.vmem [#allocation11], %s766
        // Predicated region
        $region57: #{tpu_custom_call.1} parent=39 // pred_check
          %p768 = pneg %p184
        $region58: #{tpu_custom_call.1} parent=39 // pred_check_branch
          %770 = sbr.rel (%p768) target = $region60
        $region59: #{tpu_custom_call.1} parent=39 // pred_region
          %s772 = ssub.s32 128, 128
          %773 = vsyncadd %s759, %s772
          %s774 = sadd.s32 %s35, %s34
          %s775 = smul.addr %s774, 128
          %s776 = scalar_lea.hbm %s5, %s775
          %s778 = sshll.u32 %s762, 4
          %s779 = int_to_ptr.vmem [resolvable:$true] %s778
          %781 = dma.vmem_to_hbm [thread:$0]  %s779, 128, %s776, %s759
        $region60: #{tpu_custom_call.1} parent=39 // pred_fallthru
          _
        // Predicated region
        $region61: #{tpu_custom_call.1} parent=39 // pred_check
          %p782 = pneg %p212
        $region62: #{tpu_custom_call.1} parent=39 // pred_check_branch
          %784 = sbr.rel (%p782) target = $region64
        $region63: #{tpu_custom_call.1} parent=39 // pred_region
          %s786 = ssub.s32 64, 64
          %787 = vsyncadd %s764, %s786
          %s788 = sadd.s32 %s35, %s34
          %s789 = smul.addr %s788, 64
          %s790 = scalar_lea.hbm %s6, %s789
          %s792 = sshll.u32 %s767, 4
          %s793 = int_to_ptr.vmem [resolvable:$true] %s792
          %795 = dma.vmem_to_hbm [thread:$0]  %s793, 64, %s790, %s764
        $region64: #{tpu_custom_call.1} parent=39 // pred_fallthru
          _
      $region40: #{tpu_custom_call.1} parent=5 // pred_fallthru
        _
      %p796 = scmp.le.s32.totalorder 2, %s25
      // Predicated region
      $region65: #{tpu_custom_call.1} parent=5 // pred_check
        %p797 = pneg %p796
      $region66: #{tpu_custom_call.1} parent=5 // pred_check_branch
        %799 = sbr.rel (%p797) target = $region68
      $region67: #{tpu_custom_call.1} parent=5 // pred_region
        %s800 = ssub.s32 %s25, 2
        // Predicated region
        $region69: #{tpu_custom_call.1} parent=67 // pred_check
          %p801 = pneg %p190
        $region70: #{tpu_custom_call.1} parent=67 // pred_check_branch
          %803 = sbr.rel (%p801) target = $region72
        $region71: #{tpu_custom_call.1} parent=67 // pred_region
          %s804 = sand.u32 %s175, 1
          %s805 = scalar_lea.sflag [#allocation6], %s804
          %s806 = sand.u32 %s175, 1
          %s807 = smul.addr %s806, 8
          %s808 = scalar_lea.vmem [#allocation10], %s807
          %809 = dma.done %s805, 128
        $region72: #{tpu_custom_call.1} parent=67 // pred_fallthru
          _
        // Predicated region
        $region73: #{tpu_custom_call.1} parent=67 // pred_check
          %p810 = pneg %p218
        $region74: #{tpu_custom_call.1} parent=67 // pred_check_branch
          %812 = sbr.rel (%p810) target = $region76
        $region75: #{tpu_custom_call.1} parent=67 // pred_region
          %s813 = sand.u32 %s203, 1
          %s814 = scalar_lea.sflag [#allocation12], %s813
          %s815 = sand.u32 %s203, 1
          %s816 = smul.addr %s815, 4
          %s817 = scalar_lea.vmem [#allocation11], %s816
          %818 = dma.done %s814, 64
        $region76: #{tpu_custom_call.1} parent=67 // pred_fallthru
          _
      $region68: #{tpu_custom_call.1} parent=5 // pred_fallthru
        _
    $region6: #{tpu_custom_call.1} parent=1 // loop_footer
      %s29 = sadd.s32 1, %s25
    $region7: #{tpu_custom_call.1} parent=1 // loop_footer_branch
      %24 = sbr.rel target = $region3
    $region8: #{tpu_custom_call.1} parent=1 // loop_exit
      _
    %819 = vsyncpa [#allocation5], 1
    %s820 = scalar_lea.sflag [#allocation5], 1
    %821 = vsyncpa %s820, 1
    %822 = vsyncpa [#allocation8], 1
    %s823 = scalar_lea.sflag [#allocation8], 1
    %824 = vsyncpa %s823, 1
    %825 = vsyncpa [#allocation6], 1
    %s826 = scalar_lea.sflag [#allocation6], 1
    %827 = vsyncpa %s826, 1
    %828 = vsyncpa [#allocation12], 1
    %s829 = scalar_lea.sflag [#allocation12], 1
    %830 = vsyncpa %s829, 1

</llo_original>
